<compile_context>
chip_gen: v5e
topology: v5e:2x2
jax: 0.10.0
libtpu: 0.0.40
codegen_flags: <defaults>
</compile_context>

<pallas_src>
import functools

import jax
import jax.numpy as jnp
from jax.experimental import pallas as pl
from jax.experimental.pallas import tpu as pltpu

LANE = 128


def _round_up(x, m):
    return (x + m - 1) // m * m


# ---------------------------------------------------------------------------
# Kernel 1: LSTM recurrence (sequential grid over T, h/c in VMEM scratch)
# ---------------------------------------------------------------------------
def _lstm_step_kernel(x_ref, wih_ref, whh_ref, b_ref, h_out_ref, h_scr, c_scr,
                      *, hidden):
    t = pl.program_id(0)

    @pl.when(t == 0)
    def _():
        h_scr[...] = jnp.zeros_like(h_scr)
        c_scr[...] = jnp.zeros_like(c_scr)

    gates = (jnp.dot(x_ref[0], wih_ref[...], preferred_element_type=jnp.float32)
             + jnp.dot(h_scr[...], whh_ref[...],
                       preferred_element_type=jnp.float32)
             + b_ref[...])
    # PyTorch gate ordering: [i, f, g, o]
    i = jax.nn.sigmoid(gates[:, 0 * hidden:1 * hidden])
    f = jax.nn.sigmoid(gates[:, 1 * hidden:2 * hidden])
    g = jnp.tanh(gates[:, 2 * hidden:3 * hidden])
    o = jax.nn.sigmoid(gates[:, 3 * hidden:4 * hidden])
    c_new = f * c_scr[...] + i * g
    h_new = o * jnp.tanh(c_new)
    c_scr[...] = c_new
    h_scr[...] = h_new
    h_out_ref[0] = h_new


def lstm_pallas(x, p):
    """Single-layer batch_first LSTM.  x: (B, T, In) -> (B, T, H)."""
    B, T, In = x.shape
    H = p["whh"].shape[1]
    H4 = 4 * H
    B_pad = _round_up(max(B, 8), 8)
    In_pad = _round_up(max(In, LANE), LANE)        # lane-dense LHS load

    xt = jnp.transpose(x, (1, 0, 2)).astype(jnp.float32)        # (T, B, In)
    xt = jnp.pad(xt, ((0, 0), (0, B_pad - B), (0, In_pad - In)))
    wih_t = jnp.pad(p["wih"].T, ((0, In_pad - In), (0, 0))).astype(jnp.float32)
    whh_t = p["whh"].T.astype(jnp.float32)                      # (H, 4H)
    bias = (p["bih"] + p["bhh"]).reshape(1, H4).astype(jnp.float32)

    h_seq = pl.pallas_call(
        functools.partial(_lstm_step_kernel, hidden=H),
        out_shape=jax.ShapeDtypeStruct((T, B_pad, H), jnp.float32),
        grid_spec=pltpu.PrefetchScalarGridSpec(
            num_scalar_prefetch=0,
            grid=(T,),
            in_specs=[
                pl.BlockSpec((1, B_pad, In_pad), lambda t: (t, 0, 0)),
                pl.BlockSpec((In_pad, H4), lambda t: (0, 0)),
                pl.BlockSpec((H, H4), lambda t: (0, 0)),
                pl.BlockSpec((1, H4), lambda t: (0, 0)),
            ],
            out_specs=pl.BlockSpec((1, B_pad, H), lambda t: (t, 0, 0)),
            scratch_shapes=[pltpu.VMEM((B_pad, H), jnp.float32),
                            pltpu.VMEM((B_pad, H), jnp.float32)]),
        compiler_params=pltpu.CompilerParams(
            dimension_semantics=("arbitrary",)),
    )(xt, wih_t, whh_t, bias)
    return jnp.transpose(h_seq[:, :B, :], (1, 0, 2))            # (B, T, H)


# ---------------------------------------------------------------------------
# Kernel 2: one fused MyTemporalBlock (conv1+relu+conv2+relu+residual+relu)
# ---------------------------------------------------------------------------
def _tcn_block_kernel(x_ref, w1_ref, b1_ref, w2_ref, b2_ref, *rest,
                      k, d, t_in, has_ds, cp):
    if has_ds:
        wd_ref, bd_ref, o_ref = rest
    else:
        (o_ref,) = rest
    pad = (k - 1) * d
    t1 = t_in - pad          # length after conv1 (valid, dilation d)
    t2 = t_in - 2 * pad      # length after conv2

    x = x_ref[0]                                             # (t_in, cp) f32

    # conv1 as k shifted matmuls (no im2col), bf16 operands, f32 accumulate
    acc1 = jnp.zeros((t1, cp), jnp.float32) + b1_ref[...]
    for j in range(k):
        acc1 = acc1 + jnp.dot(x[j * d:j * d + t1, :].astype(jnp.bfloat16),
                              w1_ref[j], preferred_element_type=jnp.float32)
    out1 = jnp.maximum(acc1, 0.0)          # dropout1 = identity (eval)

    # conv2 — out1 never leaves VMEM / vregs
    acc2 = jnp.zeros((t2, cp), jnp.float32) + b2_ref[...]
    for j in range(k):
        acc2 = acc2 + jnp.dot(out1[j * d:j * d + t2, :].astype(jnp.bfloat16),
                              w2_ref[j], preferred_element_type=jnp.float32)
    out2 = jnp.maximum(acc2, 0.0)          # dropout2 = identity (eval)

    # residual: x[:, pad:-pad], optionally 1x1 downsample conv, fused here
    res = x[pad:pad + t2, :]
    if has_ds:
        res = (jnp.dot(res.astype(jnp.bfloat16), wd_ref[...],
                       preferred_element_type=jnp.float32) + bd_ref[...])
    o_ref[0] = jnp.maximum(out2 + res, 0.0)


def tcn_block_pallas(y, p, *, dilation, cp):
    """One MyTemporalBlock.  y: (B, T_in, cp) f32 with channels zero-padded."""
    B, T_in, _ = y.shape
    cout, cin, k = p["w1"].shape
    pad = (k - 1) * dilation
    T2 = T_in - 2 * pad
    assert T2 > 0, "sequence too short for this dilation / kernel size"

    # Conv1d weight (Cout, Cin, k) -> per-tap (Cin_pad, Cout_pad) matrices
    w1 = jnp.zeros((k, cp, cp), jnp.float32)
    w1 = w1.at[:, :cin, :cout].set(jnp.transpose(p["w1"], (2, 1, 0)))
    w2 = jnp.zeros((k, cp, cp), jnp.float32)
    w2 = w2.at[:, :cout, :cout].set(jnp.transpose(p["w2"], (2, 1, 0)))
    b1 = jnp.zeros((1, cp), jnp.float32).at[0, :cout].set(p["b1"])
    b2 = jnp.zeros((1, cp), jnp.float32).at[0, :cout].set(p["b2"])

    has_ds = "wd" in p
    in_specs = [
        pl.BlockSpec((1, T_in, cp), lambda b: (b, 0, 0)),
        pl.BlockSpec((k, cp, cp), lambda b: (0, 0, 0)),
        pl.BlockSpec((1, cp), lambda b: (0, 0)),
        pl.BlockSpec((k, cp, cp), lambda b: (0, 0, 0)),
        pl.BlockSpec((1, cp), lambda b: (0, 0)),
    ]
    args = [y, w1.astype(jnp.bfloat16), b1, w2.astype(jnp.bfloat16), b2]
    if has_ds:
        wd = jnp.zeros((cp, cp), jnp.float32)
        wd = wd.at[:cin, :cout].set(p["wd"][:, :, 0].T)
        bd = jnp.zeros((1, cp), jnp.float32).at[0, :cout].set(p["bd"])
        in_specs += [pl.BlockSpec((cp, cp), lambda b: (0, 0)),
                     pl.BlockSpec((1, cp), lambda b: (0, 0))]
        args += [wd.astype(jnp.bfloat16), bd]

    return pl.pallas_call(
        functools.partial(_tcn_block_kernel, k=k, d=dilation, t_in=T_in,
                          has_ds=has_ds, cp=cp),
        out_shape=jax.ShapeDtypeStruct((B, T2, cp), jnp.float32),
        grid_spec=pltpu.PrefetchScalarGridSpec(
            num_scalar_prefetch=0,
            grid=(B,),
            in_specs=in_specs,
            out_specs=pl.BlockSpec((1, T2, cp), lambda b: (b, 0, 0))),
        compiler_params=pltpu.CompilerParams(
            dimension_semantics=("parallel",)),
    )(*args)


# ---------------------------------------------------------------------------
# Kernel 3: fused fc1 -> relu -> fc2 head
# ---------------------------------------------------------------------------
def _mlp_kernel(x_ref, w1_ref, b1_ref, w2_ref, b2_ref, o_ref):
    h = (jnp.dot(x_ref[...].astype(jnp.bfloat16), w1_ref[...],
                 preferred_element_type=jnp.float32) + b1_ref[...])
    h = jnp.maximum(h, 0.0)
    o_ref[...] = (jnp.dot(h.astype(jnp.bfloat16), w2_ref[...],
                          preferred_element_type=jnp.float32) + b2_ref[...])


def mlp_head_pallas(y, fc1_w, fc1_b, fc2_w, fc2_b):
    """relu(y @ fc1.T + b1) @ fc2.T + b2, per (batch, time) row."""
    B, T, cp = y.shape
    hid2, c_last = fc1_w.shape
    out_size = fc2_w.shape[0]
    np_ = _round_up(max(hid2, out_size, LANE), LANE)
    M = B * T
    M_pad = _round_up(max(M, 8), 8)

    x2 = jnp.pad(y.reshape(M, cp), ((0, M_pad - M), (0, 0)))
    w1 = jnp.zeros((cp, np_), jnp.float32).at[:c_last, :hid2].set(fc1_w.T)
    b1 = jnp.zeros((1, np_), jnp.float32).at[0, :hid2].set(fc1_b)
    w2 = jnp.zeros((np_, np_), jnp.float32).at[:hid2, :out_size].set(fc2_w.T)
    b2 = jnp.zeros((1, np_), jnp.float32).at[0, :out_size].set(fc2_b)

    out = pl.pallas_call(
        _mlp_kernel,
        out_shape=jax.ShapeDtypeStruct((M_pad, np_), jnp.float32),
        grid_spec=pltpu.PrefetchScalarGridSpec(
            num_scalar_prefetch=0,
            grid=(1,),
            in_specs=[pl.BlockSpec((M_pad, cp), lambda i: (0, 0)),
                      pl.BlockSpec((cp, np_), lambda i: (0, 0)),
                      pl.BlockSpec((1, np_), lambda i: (0, 0)),
                      pl.BlockSpec((np_, np_), lambda i: (0, 0)),
                      pl.BlockSpec((1, np_), lambda i: (0, 0))],
            out_specs=pl.BlockSpec((M_pad, np_), lambda i: (0, 0))),
        compiler_params=pltpu.CompilerParams(
            dimension_semantics=("arbitrary",)),
    )(x2, w1.astype(jnp.bfloat16), b1, w2.astype(jnp.bfloat16), b2)
    return out[:M, :out_size].reshape(B, T, out_size)


# ---------------------------------------------------------------------------
# Full forward
# ---------------------------------------------------------------------------
def lstmtcn_forward(x, params):
    """x: (B, T, input_size) -> (B, T_out, output_size)."""
    H = params["lstm"]["whh"].shape[1]

    h = lstm_pallas(x, params["lstm"])                       # (B, T, H)

    # pad channel dim to a lane-dense width once, up front
    chans = [H] + [p["w1"].shape[0] for p in params["tcn"]]
    cp = _round_up(max(chans), LANE)
    y = jnp.pad(h, ((0, 0), (0, 0), (0, cp - H)))            # (B, T, cp)
    for i, p in enumerate(params["tcn"]):
        y = tcn_block_pallas(y, p, dilation=2 ** i, cp=cp)

    return mlp_head_pallas(y, params["fc1_w"], params["fc1_b"],
                           params["fc2_w"], params["fc2_b"])


# ---------------------------------------------------------------------------
# Deterministic parameter init + pure-JAX reference
# ---------------------------------------------------------------------------
def init_params(key, input_size, hidden, num_channels, k, out_size):
    keys = iter(jax.random.split(key, 64))

    def nrm(shape, std):
        return std * jax.random.normal(next(keys), shape, jnp.float32)

    H4 = 4 * hidden
    params = {
        "lstm": {"wih": nrm((H4, input_size), 0.3),
                 "whh": nrm((H4, hidden), 0.3),
                 "bih": nrm((H4,), 0.1),
                 "bhh": nrm((H4,), 0.1)},
        "tcn": [],
    }
    cin = hidden
    for cout in num_channels:
        p = {"w1": nrm((cout, cin, k), 0.1), "b1": nrm((cout,), 0.1),
             "w2": nrm((cout, cout, k), 0.1), "b2": nrm((cout,), 0.1)}
        if cin != cout:                       # downsample 1x1 conv
            p["wd"] = nrm((cout, cin, 1), 0.1)
            p["bd"] = nrm((cout,), 0.1)
        params["tcn"].append(p)
        cin = cout
    hid2 = num_channels[-1] // 2
    params["fc1_w"] = nrm((hid2, num_channels[-1]), 0.2)
    params["fc1_b"] = nrm((hid2,), 0.1)
    params["fc2_w"] = nrm((out_size, hid2), 0.2)
    params["fc2_b"] = nrm((out_size,), 0.1)
    return params


def _lstm_ref(x, p):
    B, _, _ = x.shape
    H = p["whh"].shape[1]
    wih, whh = p["wih"], p["whh"]
    b = p["bih"] + p["bhh"]

    def step(carry, xt):
        h, c = carry
        gates = xt @ wih.T + h @ whh.T + b
        i, f, g, o = jnp.split(gates, 4, axis=-1)
        i = jax.nn.sigmoid(i)
        f = jax.nn.sigmoid(f)
        g = jnp.tanh(g)
        o = jax.nn.sigmoid(o)
        c = f * c + i * g
        h = o * jnp.tanh(c)
        return (h, c), h

    init = (jnp.zeros((B, H), jnp.float32), jnp.zeros((B, H), jnp.float32))
    _, hs = jax.lax.scan(step, init, jnp.transpose(x, (1, 0, 2)))
    return jnp.transpose(hs, (1, 0, 2))


def _conv1d_ref(x, w, b, d):
    y = jax.lax.conv_general_dilated(
        x, w, window_strides=(1,), padding=[(0, 0)], rhs_dilation=(d,),
        dimension_numbers=("NCH", "OIH", "NCH"))
    return y + b[None, :, None]


def _tcn_block_ref(x, p, d, k):
    out = jax.nn.relu(_conv1d_ref(x, p["w1"], p["b1"], d))
    out = jax.nn.relu(_conv1d_ref(out, p["w2"], p["b2"], d))
    pad = (k - 1) * d
    res = x[:, :, pad:-pad]
    if "wd" in p:
        res = _conv1d_ref(res, p["wd"], p["bd"], 1)
    return jax.nn.relu(out + res)


def reference_forward(x, params, kernel_size):
    h = _lstm_ref(x, params["lstm"])
    y = jnp.transpose(h, (0, 2, 1))                  # (B, H, T)
    for i, p in enumerate(params["tcn"]):
        y = _tcn_block_ref(y, p, 2 ** i, kernel_size)
    y = jnp.transpose(y, (0, 2, 1))                  # (B, T', C_last)
    z = jax.nn.relu(jnp.einsum("btc,hc->bth", y, params["fc1_w"])
                    + params["fc1_b"])
    z = jnp.einsum("bth,oh->bto", z, params["fc2_w"]) + params["fc2_b"]
    return z


if __name__ == "__main__":
    key = jax.random.PRNGKey(0)
    k_x, k_p = jax.random.split(key)

    B, T, input_size = 2, 32, 6
    hidden = 32
    num_channels = (48, 32)        # level 0 exercises the downsample conv
    kernel_size = 3
    output_size = 4

    x = jax.random.normal(k_x, (B, T, input_size), jnp.float32)
    params = init_params(k_p, input_size, hidden, num_channels,
                         kernel_size, output_size)

    out = jax.block_until_ready(lstmtcn_forward(x, params))
    ref = jax.block_until_ready(reference_forward(x, params, kernel_size))

    T_final = T - sum(2 * (kernel_size - 1) * (2 ** i)
                      for i in range(len(num_channels)))
    assert out.shape == (B, T_final, output_size), out.shape
    max_err = float(jnp.max(jnp.abs(out - ref)))
    assert jnp.allclose(out, ref, rtol=5e-2, atol=1e-2), max_err

    print("KERNEL_OK")
</pallas_src>

<mosaic_0001>
module attributes {stable_mosaic.version = 11 : i64} {
  func.func @_lstm_step_kernel(%arg0: i32, %arg1: memref<1x8x128xf32, #tpu.memory_space<vmem>>, %arg2: memref<128x128xf32, #tpu.memory_space<vmem>>, %arg3: memref<32x128xf32, #tpu.memory_space<vmem>>, %arg4: memref<1x128xf32, #tpu.memory_space<vmem>>, %arg5: memref<1x8x32xf32, #tpu.memory_space<vmem>>, %arg6: memref<8x32xf32, #tpu.memory_space<vmem>>, %arg7: memref<8x32xf32, #tpu.memory_space<vmem>>) attributes {dimension_semantics = [#tpu.dimension_semantics<arbitrary>], iteration_bounds = array<i64: 32>, scalar_prefetch = 0 : i64, scratch_operands = 2 : i64, tpu.core_type = #tpu.core_type<tc>, window_params = [{transform_indices = @transform_0, window_bounds = array<i64: 1, 8, 128>}, {pipeline_mode = #tpu.pipeline_mode<synchronous>, transform_indices = @transform_1, window_bounds = array<i64: 128, 128>}, {pipeline_mode = #tpu.pipeline_mode<synchronous>, transform_indices = @transform_2, window_bounds = array<i64: 32, 128>}, {pipeline_mode = #tpu.pipeline_mode<synchronous>, transform_indices = @transform_3, window_bounds = array<i64: 1, 128>}, {transform_indices = @transform_4, window_bounds = array<i64: 1, 8, 32>}]} {
    %c0_i32 = arith.constant 0 : i32
    %0 = arith.cmpi eq, %arg0, %c0_i32 : i32
    %1 = arith.extui %0 : i1 to i32
    %c0_i32_0 = arith.constant 0 : i32
    %2 = arith.cmpi ne, %1, %c0_i32_0 : i32
    scf.if %2 {
      %cst_24 = arith.constant 0.000000e+00 : f32
      %45 = vector.broadcast %cst_24 : f32 to vector<8x32xf32>
      %c0_25 = arith.constant 0 : index
      %c0_26 = arith.constant 0 : index
      %46 = vector.load %arg6[%c0_25, %c0_26] : memref<8x32xf32, #tpu.memory_space<vmem>>, vector<8x32xf32>
      tpu.vector_store %arg6[%c0_25, %c0_26], %45 {strides = array<i32>} : memref<8x32xf32, #tpu.memory_space<vmem>>, vector<8x32xf32>,
      %cst_27 = arith.constant 0.000000e+00 : f32
      %47 = vector.broadcast %cst_27 : f32 to vector<8x32xf32>
      %c0_28 = arith.constant 0 : index
      %c0_29 = arith.constant 0 : index
      %48 = vector.load %arg7[%c0_28, %c0_29] : memref<8x32xf32, #tpu.memory_space<vmem>>, vector<8x32xf32>
      tpu.vector_store %arg7[%c0_28, %c0_29], %47 {strides = array<i32>} : memref<8x32xf32, #tpu.memory_space<vmem>>, vector<8x32xf32>,
    } else {
    }
    %c0 = arith.constant 0 : index
    %c0_1 = arith.constant 0 : index
    %c0_2 = arith.constant 0 : index
    %3 = vector.load %arg1[%c0, %c0_1, %c0_2] : memref<1x8x128xf32, #tpu.memory_space<vmem>>, vector<1x8x128xf32>
    %4 = vector.shape_cast %3 : vector<1x8x128xf32> to vector<8x128xf32>
    %c0_3 = arith.constant 0 : index
    %c0_4 = arith.constant 0 : index
    %5 = vector.load %arg2[%c0_3, %c0_4] : memref<128x128xf32, #tpu.memory_space<vmem>>, vector<128x128xf32>
    %cst = arith.constant dense<0.000000e+00> : vector<8x128xf32>
    %6 = tpu.matmul %4, %5, %cst {dimension_numbers = #tpu.dot_dimension_numbers<[1], [0], [0], [1], [0, 0, 1, 1], [], []>} : vector<8x128xf32>, vector<128x128xf32>, vector<8x128xf32> -> vector<8x128xf32>
    %c0_5 = arith.constant 0 : index
    %c0_6 = arith.constant 0 : index
    %7 = vector.load %arg6[%c0_5, %c0_6] : memref<8x32xf32, #tpu.memory_space<vmem>>, vector<8x32xf32>
    %c0_7 = arith.constant 0 : index
    %c0_8 = arith.constant 0 : index
    %8 = vector.load %arg3[%c0_7, %c0_8] : memref<32x128xf32, #tpu.memory_space<vmem>>, vector<32x128xf32>
    %cst_9 = arith.constant dense<0.000000e+00> : vector<8x128xf32>
    %9 = tpu.matmul %7, %8, %cst_9 {dimension_numbers = #tpu.dot_dimension_numbers<[1], [0], [0], [1], [0, 0, 1, 1], [], []>} : vector<8x32xf32>, vector<32x128xf32>, vector<8x128xf32> -> vector<8x128xf32>
    %10 = arith.addf %6, %9 : vector<8x128xf32>
    %c0_10 = arith.constant 0 : index
    %c0_11 = arith.constant 0 : index
    %11 = vector.load %arg4[%c0_10, %c0_11] : memref<1x128xf32, #tpu.memory_space<vmem>>, vector<1x128xf32>
    %12 = vector.broadcast %11 : vector<1x128xf32> to vector<8x128xf32>
    %13 = arith.addf %10, %12 : vector<8x128xf32>
    %14 = vector.extract_strided_slice %13 {offsets = [0, 0], sizes = [8, 32], strides = [1, 1]} : vector<8x128xf32> to vector<8x32xf32>
    %15 = arith.negf %14 : vector<8x32xf32>
    %16 = math.exp %15 : vector<8x32xf32>
    %cst_12 = arith.constant 1.000000e+00 : f32
    %17 = vector.broadcast %cst_12 : f32 to vector<8x32xf32>
    %18 = arith.addf %17, %16 : vector<8x32xf32>
    %19 = arith.divf %17, %18 : vector<8x32xf32>
    %20 = vector.extract_strided_slice %13 {offsets = [0, 32], sizes = [8, 32], strides = [1, 1]} : vector<8x128xf32> to vector<8x32xf32>
    %21 = arith.negf %20 : vector<8x32xf32>
    %22 = math.exp %21 : vector<8x32xf32>
    %cst_13 = arith.constant 1.000000e+00 : f32
    %23 = vector.broadcast %cst_13 : f32 to vector<8x32xf32>
    %24 = arith.addf %23, %22 : vector<8x32xf32>
    %25 = arith.divf %23, %24 : vector<8x32xf32>
    %26 = vector.extract_strided_slice %13 {offsets = [0, 64], sizes = [8, 32], strides = [1, 1]} : vector<8x128xf32> to vector<8x32xf32>
    %27 = math.tanh %26 : vector<8x32xf32>
    %28 = vector.extract_strided_slice %13 {offsets = [0, 96], sizes = [8, 32], strides = [1, 1]} : vector<8x128xf32> to vector<8x32xf32>
    %29 = arith.negf %28 : vector<8x32xf32>
    %30 = math.exp %29 : vector<8x32xf32>
    %cst_14 = arith.constant 1.000000e+00 : f32
    %31 = vector.broadcast %cst_14 : f32 to vector<8x32xf32>
    %32 = arith.addf %31, %30 : vector<8x32xf32>
    %33 = arith.divf %31, %32 : vector<8x32xf32>
    %c0_15 = arith.constant 0 : index
    %c0_16 = arith.constant 0 : index
    %34 = vector.load %arg7[%c0_15, %c0_16] : memref<8x32xf32, #tpu.memory_space<vmem>>, vector<8x32xf32>
    %35 = arith.mulf %25, %34 : vector<8x32xf32>
    %36 = arith.mulf %19, %27 : vector<8x32xf32>
    %37 = arith.addf %35, %36 : vector<8x32xf32>
    %38 = math.tanh %37 : vector<8x32xf32>
    %39 = arith.mulf %33, %38 : vector<8x32xf32>
    %c0_17 = arith.constant 0 : index
    %c0_18 = arith.constant 0 : index
    %40 = vector.load %arg7[%c0_17, %c0_18] : memref<8x32xf32, #tpu.memory_space<vmem>>, vector<8x32xf32>
    tpu.vector_store %arg7[%c0_17, %c0_18], %37 {strides = array<i32>} : memref<8x32xf32, #tpu.memory_space<vmem>>, vector<8x32xf32>,
    %c0_19 = arith.constant 0 : index
    %c0_20 = arith.constant 0 : index
    %41 = vector.load %arg6[%c0_19, %c0_20] : memref<8x32xf32, #tpu.memory_space<vmem>>, vector<8x32xf32>
    tpu.vector_store %arg6[%c0_19, %c0_20], %39 {strides = array<i32>} : memref<8x32xf32, #tpu.memory_space<vmem>>, vector<8x32xf32>,
    %c0_21 = arith.constant 0 : index
    %c0_22 = arith.constant 0 : index
    %c0_23 = arith.constant 0 : index
    %42 = vector.load %arg5[%c0_21, %c0_22, %c0_23] : memref<1x8x32xf32, #tpu.memory_space<vmem>>, vector<1x8x32xf32>
    %43 = vector.shape_cast %42 : vector<1x8x32xf32> to vector<8x32xf32>
    %44 = vector.shape_cast %39 : vector<8x32xf32> to vector<1x8x32xf32>
    tpu.vector_store %arg5[%c0_21, %c0_22, %c0_23], %44 {strides = array<i32>} : memref<1x8x32xf32, #tpu.memory_space<vmem>>, vector<1x8x32xf32>,
    return
  }
  func.func @transform_0(%arg0: i32) -> (i32, i32, i32) {
    %c0_i32 = arith.constant 0 : i32
    %c0_i32_0 = arith.constant 0 : i32
    %c0_i32_1 = arith.constant 0 : i32
    return %arg0, %c0_i32, %c0_i32_0 : i32, i32, i32
  }
  func.func @transform_1(%arg0: i32) -> (i32, i32) {
    %c0_i32 = arith.constant 0 : i32
    %c0_i32_0 = arith.constant 0 : i32
    %c0_i32_1 = arith.constant 0 : i32
    return %c0_i32, %c0_i32_0 : i32, i32
  }
  func.func @transform_2(%arg0: i32) -> (i32, i32) {
    %c0_i32 = arith.constant 0 : i32
    %c0_i32_0 = arith.constant 0 : i32
    %c0_i32_1 = arith.constant 0 : i32
    return %c0_i32, %c0_i32_0 : i32, i32
  }
  func.func @transform_3(%arg0: i32) -> (i32, i32) {
    %c0_i32 = arith.constant 0 : i32
    %c0_i32_0 = arith.constant 0 : i32
    %c0_i32_1 = arith.constant 0 : i32
    return %c0_i32, %c0_i32_0 : i32, i32
  }
  func.func @transform_4(%arg0: i32) -> (i32, i32, i32) {
    %c0_i32 = arith.constant 0 : i32
    %c0_i32_0 = arith.constant 0 : i32
    %c0_i32_1 = arith.constant 0 : i32
    return %arg0, %c0_i32, %c0_i32_0 : i32, i32, i32
  }
}

</mosaic_0001>

<llo_original>
// kernel: tpu_custom_call.1
$region0: #{tpu_custom_call.1}
  #allocation0 [shape = 'u32[]', space=smem, size = 0x4, offset = 0x4, fixed_abs, tag = 'smem constant byte address 0x4 - core index']
  #allocation1 [shape = 'u32[72,128]{1,0:T(1,128)}', space=vmem, size = 0x9000, scoped, tag = 'internal scratch']
  #allocation2 [shape = 'f32[8,32]{1,0:T(8,128)}', space=vmem, size = 0x1000, scoped, tag = 'scratch operand']
  #allocation3 [shape = 'f32[8,32]{1,0:T(8,128)}', space=vmem, size = 0x1000, scoped, tag = 'scratch operand']
  %s0 = inlined_call_operand.hbm [shape: f32[32,8,128], index: 0, kind: input, shape index: {}]
  %s1 = inlined_call_operand.hbm [shape: f32[128,128], index: 1, kind: input, shape index: {}]
  %s2 = inlined_call_operand.hbm [shape: f32[32,128], index: 2, kind: input, shape index: {}]
  %s3 = inlined_call_operand.vmem [shape: f32[1,128], index: 3, kind: input, shape index: {}]
  %s4 = inlined_call_operand.hbm [shape: f32[32,8,32], index: 4, kind: output, shape index: {}]
  %s5 = sld [smem:[#allocation0]]
  $region65: #{tpu_custom_call.1} parent=0
    _
  %s7 = ssub.s32 1, %s5
  %s8 = scalar_select 0, %s7, %s5
  $region1: #{tpu_custom_call.1} parent=0
    #allocation4 [shape = 'u8[8192]{0}', space=vmem, size = 0x2000, scoped, tag = 'input window, operand 0']
    #allocation5 [shape = 's32[2]{0}', space=sflag, size = 0x8, scoped, tag = 'scoped memory for tpu_custom_call.1']
    #allocation6 [shape = 's32[2]{0}', space=sflag, size = 0x8, scoped, tag = 'scoped memory for tpu_custom_call.1']
    #allocation7 [shape = 'u8[65536]{0}', space=vmem, size = 0x10000, scoped, tag = 'input window, operand 1, single buffered']
    #allocation8 [shape = 's32[1]{0}', space=sflag, size = 0x4, scoped, tag = 'scoped memory for tpu_custom_call.1']
    #allocation9 [shape = 'u8[16384]{0}', space=vmem, size = 0x4000, scoped, tag = 'input window, operand 2, single buffered']
    #allocation10 [shape = 'u8[8192]{0}', space=vmem, size = 0x2000, scoped, tag = 'output window, operand 0']
    %9 = vsyncpa [#allocation5], 0
    %s10 = scalar_lea.sflag [#allocation5], 1
    %11 = vsyncpa %s10, 0
    %12 = vsyncpa [#allocation8], 0
    %13 = vsyncpa [#allocation6], 0
    %s14 = scalar_lea.sflag [#allocation6], 1
    %15 = vsyncpa %s14, 0
    loop: start=0, step=1, limit=34
    $region2: #{tpu_custom_call.1} parent=1 // loop_pre_header
      _
    $region3: #{tpu_custom_call.1} parent=1 // loop_header
      %s17 = sphi 0, %s21
      %p18 = scmp.ge.s32.totalorder %s17, 34
      %s27 = sphi 0, %s29
      %s30 = sphi 0, %s27
      %s31 = sphi 0, %s30
      %s47 = sphi 0, %s31
      %s51 = sphi 0, %s51
      %s53 = sphi 0, %s51
      %s54 = sphi 0, %s53
      %s68 = sphi 0, %s54
      %s72 = sphi 0, %s72
      %s74 = sphi 0, %s72
      %s75 = sphi 0, %s74
      %s89 = sphi 0, %s75
      %s93 = sphi 0, %s93
      %s95 = sphi 0, %s93
      %s96 = sphi 0, %s95
      %s110 = sphi 0, %s96
      %s116 = sphi 0, %s118
      %s119 = sphi 0, %s116
      %s120 = sphi 0, %s119
      %s136 = sphi 0, %s120
    $region4: #{tpu_custom_call.1} parent=1 // loop_header_branch
      %20 = sbr.rel (%p18) target = $region8
    $region5: #{tpu_custom_call.1} parent=1 // loop_body
      %s22 = ssub.s32 %s17, 1
      %s23 = ssub.s32 %s17, 2
      %s24 = sadd.s32 %s17, 1
      %s25 = ssub.s32 %s17, %s24
      %p26 = scmp.eq.s32.totalorder %s25, 0
      %s28 = sadd.s32 %s27, 1
      %s29 = scalar_select %p26, %s27, %s28
      %p32 = pneg %p26
      %p33 = scmp.eq.s32.totalorder %s17, 31
      %p34 = por %p32, %p33
      %p35 = scmp.ne.s32.totalorder %s27, %s30
      %p36 = scmp.eq.s32.totalorder %s17, 0
      %p37 = por %p35, %p36
      %p38 = scmp.ne.s32.totalorder %s27, %s30
      %p39 = scmp.eq.s32.totalorder %s22, 31
      %p40 = por %p38, %p39
      %p41 = scmp.ne.s32.totalorder %s30, %s31
      %p42 = scmp.eq.s32.totalorder %s22, 0
      %p43 = por %p41, %p42
      %p44 = scmp.ne.s32.totalorder %s30, %s31
      %p45 = scmp.eq.s32.totalorder %s23, 31
      %p46 = por %p44, %p45
      %p48 = scmp.ne.s32.totalorder %s31, %s47
      %p49 = scmp.eq.s32.totalorder %s23, 0
      %p50 = por %p48, %p49
      %s52 = sadd.s32 %s51, 1
      %p55 = scmp.eq.s32.totalorder %s17, 31
      %p56 = scmp.ne.s32.totalorder %s51, %s53
      %p57 = scmp.eq.s32.totalorder %s17, 0
      %p58 = por %p56, %p57
      %p59 = scmp.ne.s32.totalorder %s51, %s53
      %p60 = scmp.eq.s32.totalorder %s22, 31
      %p61 = por %p59, %p60
      %p62 = scmp.ne.s32.totalorder %s53, %s54
      %p63 = scmp.eq.s32.totalorder %s22, 0
      %p64 = por %p62, %p63
      %p65 = scmp.ne.s32.totalorder %s53, %s54
      %p66 = scmp.eq.s32.totalorder %s23, 31
      %p67 = por %p65, %p66
      %p69 = scmp.ne.s32.totalorder %s54, %s68
      %p70 = scmp.eq.s32.totalorder %s23, 0
      %p71 = por %p69, %p70
      %s73 = sadd.s32 %s72, 1
      %p76 = scmp.eq.s32.totalorder %s17, 31
      %p77 = scmp.ne.s32.totalorder %s72, %s74
      %p78 = scmp.eq.s32.totalorder %s17, 0
      %p79 = por %p77, %p78
      %p80 = scmp.ne.s32.totalorder %s72, %s74
      %p81 = scmp.eq.s32.totalorder %s22, 31
      %p82 = por %p80, %p81
      %p83 = scmp.ne.s32.totalorder %s74, %s75
      %p84 = scmp.eq.s32.totalorder %s22, 0
      %p85 = por %p83, %p84
      %p86 = scmp.ne.s32.totalorder %s74, %s75
      %p87 = scmp.eq.s32.totalorder %s23, 31
      %p88 = por %p86, %p87
      %p90 = scmp.ne.s32.totalorder %s75, %s89
      %p91 = scmp.eq.s32.totalorder %s23, 0
      %p92 = por %p90, %p91
      %s94 = sadd.s32 %s93, 1
      %p97 = scmp.eq.s32.totalorder %s17, 31
      %p98 = scmp.ne.s32.totalorder %s93, %s95
      %p99 = scmp.eq.s32.totalorder %s17, 0
      %p100 = por %p98, %p99
      %p101 = scmp.ne.s32.totalorder %s93, %s95
      %p102 = scmp.eq.s32.totalorder %s22, 31
      %p103 = por %p101, %p102
      %p104 = scmp.ne.s32.totalorder %s95, %s96
      %p105 = scmp.eq.s32.totalorder %s22, 0
      %p106 = por %p104, %p105
      %p107 = scmp.ne.s32.totalorder %s95, %s96
      %p108 = scmp.eq.s32.totalorder %s23, 31
      %p109 = por %p107, %p108
      %p111 = scmp.ne.s32.totalorder %s96, %s110
      %p112 = scmp.eq.s32.totalorder %s23, 0
      %p113 = por %p111, %p112
      %s114 = ssub.s32 %s17, %s24
      %p115 = scmp.eq.s32.totalorder %s114, 0
      %s117 = sadd.s32 %s116, 1
      %s118 = scalar_select %p115, %s116, %s117
      %p121 = pneg %p115
      %p122 = scmp.eq.s32.totalorder %s17, 31
      %p123 = por %p121, %p122
      %p124 = scmp.ne.s32.totalorder %s116, %s119
      %p125 = scmp.eq.s32.totalorder %s17, 0
      %p126 = por %p124, %p125
      %p127 = scmp.ne.s32.totalorder %s116, %s119
      %p128 = scmp.eq.s32.totalorder %s22, 31
      %p129 = por %p127, %p128
      %p130 = scmp.ne.s32.totalorder %s119, %s120
      %p131 = scmp.eq.s32.totalorder %s22, 0
      %p132 = por %p130, %p131
      %p133 = scmp.ne.s32.totalorder %s119, %s120
      %p134 = scmp.eq.s32.totalorder %s23, 31
      %p135 = por %p133, %p134
      %p137 = scmp.ne.s32.totalorder %s120, %s136
      %p138 = scmp.eq.s32.totalorder %s23, 0
      %p139 = por %p137, %p138
      %p140 = scmp.le.s32.totalorder 1, %s17
      %p141 = scmp.lt.s32.totalorder %s17, 33
      %p142 = pnand %p140, %p141
      %p143 = pneg %p142
      // Predicated region
      $region9: #{tpu_custom_call.1} parent=5 // pred_check
        _
      $region10: #{tpu_custom_call.1} parent=5 // pred_check_branch
        %145 = sbr.rel (%p142) target = $region12
      $region11: #{tpu_custom_call.1} parent=5 // pred_region
        %s146 = ssub.s32 %s17, 1
        // Predicated region
        $region13: #{tpu_custom_call.1} parent=11 // pred_check
          %p147 = pneg %p64
        $region14: #{tpu_custom_call.1} parent=11 // pred_check_branch
          %149 = sbr.rel (%p147) target = $region16
        $region15: #{tpu_custom_call.1} parent=11 // pred_region
          %151 = vsyncadd [#allocation8], 0
          %s152 = sshll.u32 %s1, 4
          %s153 = int_to_ptr.hbm [resolvable:$true] %s152
          %s154 = sshll.u32 [#allocation7], 4
          %s155 = int_to_ptr.vmem [resolvable:$true] %s154
          %160 = dma.hbm_to_vmem [thread:$0]  %s153, 2048, %s155, [#allocation8], 128, 128, 8
        $region16: #{tpu_custom_call.1} parent=11 // pred_fallthru
          _
        // Predicated region
        $region17: #{tpu_custom_call.1} parent=11 // pred_check
          %p161 = pneg %p85
        $region18: #{tpu_custom_call.1} parent=11 // pred_check_branch
          %163 = sbr.rel (%p161) target = $region20
        $region19: #{tpu_custom_call.1} parent=11 // pred_region
          %165 = vsyncadd [#allocation8], 0
          %s166 = sshll.u32 %s2, 4
          %s167 = int_to_ptr.hbm [resolvable:$true] %s166
          %s168 = sshll.u32 [#allocation9], 4
          %s169 = int_to_ptr.vmem [resolvable:$true] %s168
          %174 = dma.hbm_to_vmem [thread:$0]  %s167, 512, %s169, [#allocation8], 128, 128, 8
        $region20: #{tpu_custom_call.1} parent=11 // pred_fallthru
          _
        // Predicated region
        $region21: #{tpu_custom_call.1} parent=11 // pred_check
          %p175 = pneg %p106
        $region22: #{tpu_custom_call.1} parent=11 // pred_check_branch
          %177 = sbr.rel (%p175) target = $region24
        $region23: #{tpu_custom_call.1} parent=11 // pred_region
          _
        $region24: #{tpu_custom_call.1} parent=11 // pred_fallthru
          _
      $region12: #{tpu_custom_call.1} parent=5 // pred_fallthru
        _
      %p178 = scmp.lt.s32.totalorder %s17, 32
      // Predicated region
      $region25: #{tpu_custom_call.1} parent=5 // pred_check
        %p179 = pneg %p178
      $region26: #{tpu_custom_call.1} parent=5 // pred_check_branch
        %181 = sbr.rel (%p179) target = $region28
      $region27: #{tpu_custom_call.1} parent=5 // pred_region
        // Predicated region
        $region29: #{tpu_custom_call.1} parent=27 // pred_check
          %p182 = pneg %p37
        $region30: #{tpu_custom_call.1} parent=27 // pred_check_branch
          %184 = sbr.rel (%p182) target = $region32
        $region31: #{tpu_custom_call.1} parent=27 // pred_region
          %s185 = sand.u32 %s27, 1
          %s186 = scalar_lea.sflag [#allocation5], %s185
          %s187 = sand.u32 %s27, 1
          %s188 = smul.addr %s187, 8
          %s189 = scalar_lea.vmem [#allocation4], %s188
          %191 = vsyncadd %s186, 0
          %s192 = smul.addr %s17, 8
          %s193 = scalar_lea.hbm %s0, %s192
          %s195 = sshll.u32 %s193, 4
          %s196 = int_to_ptr.hbm [resolvable:$true] %s195
          %s197 = sshll.u32 %s189, 4
          %s198 = int_to_ptr.vmem [resolvable:$true] %s197
          %200 = dma.hbm_to_vmem [thread:$0]  %s196, 128, %s198, %s186
        $region32: #{tpu_custom_call.1} parent=27 // pred_fallthru
          _
      $region28: #{tpu_custom_call.1} parent=5 // pred_fallthru
        _
      %p201 = scmp.le.s32.totalorder 1, %s17
      %p202 = scmp.lt.s32.totalorder %s17, 33
      %p203 = pnand %p201, %p202
      %p204 = pneg %p203
      // Predicated region
      $region33: #{tpu_custom_call.1} parent=5 // pred_check
        _
      $region34: #{tpu_custom_call.1} parent=5 // pred_check_branch
        %206 = sbr.rel (%p203) target = $region36
      $region35: #{tpu_custom_call.1} parent=5 // pred_region
        %s207 = ssub.s32 %s17, 1
        %s208 = sand.u32 %s30, 1
        %s209 = scalar_lea.sflag [#allocation5], %s208
        %s210 = sand.u32 %s30, 1
        %s211 = smul.addr %s210, 8
        %s212 = scalar_lea.vmem [#allocation4], %s211
        // Predicated region
        $region37: #{tpu_custom_call.1} parent=35 // pred_check
          %p213 = pneg %p43
        $region38: #{tpu_custom_call.1} parent=35 // pred_check_branch
          %215 = sbr.rel (%p213) target = $region40
        $region39: #{tpu_custom_call.1} parent=35 // pred_region
          %217 = dma.done %s209, 128
        $region40: #{tpu_custom_call.1} parent=35 // pred_fallthru
          _
        // Predicated region
        $region41: #{tpu_custom_call.1} parent=35 // pred_check
          %p218 = pneg %p64
        $region42: #{tpu_custom_call.1} parent=35 // pred_check_branch
          %220 = sbr.rel (%p218) target = $region44
        $region43: #{tpu_custom_call.1} parent=35 // pred_region
          %222 = dma.done [#allocation8], 2048
        $region44: #{tpu_custom_call.1} parent=35 // pred_fallthru
          _
        // Predicated region
        $region45: #{tpu_custom_call.1} parent=35 // pred_check
          %p223 = pneg %p85
        $region46: #{tpu_custom_call.1} parent=35 // pred_check_branch
          %225 = sbr.rel (%p223) target = $region48
        $region47: #{tpu_custom_call.1} parent=35 // pred_region
          %227 = dma.done [#allocation8], 512
        $region48: #{tpu_custom_call.1} parent=35 // pred_fallthru
          _
        %s228 = sand.u32 %s30, 1
        %s229 = scalar_lea.sflag [#allocation5], %s228
        %s230 = sand.u32 %s30, 1
        %s231 = smul.addr %s230, 8
        %s232 = scalar_lea.vmem [#allocation4], %s231
        %p233 = pneg %p43
        %p234 = pneg %p40
        %p235 = pneg %p64
        %p236 = pneg %p61
        %p237 = pneg %p85
        %p238 = pneg %p82
        %p239 = pneg %p106
        %p240 = pneg %p103
        %p241 = pneg %p132
        %p242 = pneg %p129
        %s243 = sand.u32 %s119, 1
        %s244 = scalar_lea.sflag [#allocation6], %s243
        %s245 = sand.u32 %s119, 1
        %s246 = smul.addr %s245, 8
        %s247 = scalar_lea.vmem [#allocation10], %s246
        %p248 = scmp.eq.s32.totalorder %s22, 0
        // Predicated region
        $region49: #{tpu_custom_call.1} parent=35 // pred_check
          %p249 = pneg %p248
        $region50: #{tpu_custom_call.1} parent=35 // pred_check_branch
          %251 = sbr.rel (%p249) target = $region52
        $region51: #{tpu_custom_call.1} parent=35 // pred_region
          %vm252 = vcmask 261120
          %253 = vst.msk [vmem:[#allocation2] sm:$0xff] %vm252, 0.0
          %254 = vst.msk [vmem:[#allocation3] sm:$0xff] %vm252, 0.0
        $region52: #{tpu_custom_call.1} parent=35 // pred_fallthru
          _
        %v255 = vld [vmem:[%s212] sm:$0xff]
        %v256 = vld [vmem:[#allocation7] sm:$0xff]
        %v257 = vld [vmem:[#allocation7 + $0x8] sm:$0xff]
        %v258 = vld [vmem:[#allocation7 + $0x10] sm:$0xff]
        %v259 = vld [vmem:[#allocation7 + $0x18] sm:$0xff]
        %v260 = vld [vmem:[#allocation7 + $0x20] sm:$0xff]
        %v261 = vld [vmem:[#allocation7 + $0x28] sm:$0xff]
        %v262 = vld [vmem:[#allocation7 + $0x30] sm:$0xff]
        %v263 = vld [vmem:[#allocation7 + $0x38] sm:$0xff]
        %v264 = vld [vmem:[#allocation7 + $0x40] sm:$0xff]
        %v265 = vld [vmem:[#allocation7 + $0x48] sm:$0xff]
        %v266 = vld [vmem:[#allocation7 + $0x50] sm:$0xff]
        %v267 = vld [vmem:[#allocation7 + $0x58] sm:$0xff]
        %v268 = vld [vmem:[#allocation7 + $0x60] sm:$0xff]
        %v269 = vld [vmem:[#allocation7 + $0x68] sm:$0xff]
        %v270 = vld [vmem:[#allocation7 + $0x70] sm:$0xff]
        %v271 = vld [vmem:[#allocation7 + $0x78] sm:$0xff]
        %v272 = vld [vmem:[#allocation2] sm:$0xff]
        %v273 = vld [vmem:[#allocation9] sm:$0xff]
        %v274 = vld [vmem:[#allocation9 + $0x8] sm:$0xff]
        %v275 = vld [vmem:[#allocation9 + $0x10] sm:$0xff]
        %v276 = vld [vmem:[#allocation9 + $0x18] sm:$0xff]
        %vm277 = vcmask 261120
        %v279 = vsel %vm277, %v272, 0
        %281 = vmatpush.msra.mxu0 0.0
        %282 = vmatpush.msra.mxu0 0.0
        %283 = vmatpush.msra.mxu0 0.0
        %284 = vmatpush.msra.mxu0 0.0
        %285 = vmatpush.msra.mxu0 0.0
        %286 = vmatpush.msra.mxu0 0.0
        %287 = vmatpush.msra.mxu0 0.0
        %288 = vmatpush.msra.mxu0 0.0
        %289 = vmatpush.msra.mxu0 0.0
        %290 = vmatpush.msra.mxu0 0.0
        %291 = vmatpush.msra.mxu0 0.0
        %292 = vmatpush.msra.mxu0 0.0
        %293 = vmatpush.msra.mxu0 %v276
        %294 = vmatpush.msra.mxu0 %v275
        %295 = vmatpush.msra.mxu0 %v274
        %296 = vmatpush.msra.mxu0 %v273
        %297 = vmatmul.f32.gmra.mxu0 %v279
        %v298 = vpop.f32.mrf.mxu0
        %v299 = vadd.f32 0.0, %v298
        %300 = vdwg.mxu0
        %301 = vmatpush.msra.mxu0 %v271
        %302 = vmatpush.msra.mxu0 %v270
        %303 = vmatpush.msra.mxu0 %v269
        %304 = vmatpush.msra.mxu0 %v268
        %305 = vmatpush.msra.mxu0 %v267
        %306 = vmatpush.msra.mxu0 %v266
        %307 = vmatpush.msra.mxu0 %v265
        %308 = vmatpush.msra.mxu0 %v264
        %309 = vmatpush.msra.mxu0 %v263
        %310 = vmatpush.msra.mxu0 %v262
        %311 = vmatpush.msra.mxu0 %v261
        %312 = vmatpush.msra.mxu0 %v260
        %313 = vmatpush.msra.mxu0 %v259
        %314 = vmatpush.msra.mxu0 %v258
        %315 = vmatpush.msra.mxu0 %v257
        %316 = vmatpush.msra.mxu0 %v256
        %317 = vmatmul.f32.gmra.mxu0 %v255
        %v318 = vpop.f32.mrf.mxu0
        %v319 = vadd.f32 %v299, %v318
        %320 = vdwg.mxu0
        %v321 = vld [vmem:[%s3] sm:$0x1]
        %v323 = vperm.slane %v321, 0
        %v325 = vadd.f32 %v319, %v323
        %v326 = vxor.u32 %v325, 2147483648
        %v327 = vmul.f32 %v326, 1.442695
        %v328 = vpow.pop %v327
        %v329 = vadd.f32 %v328, 1.0
        %v330 = vrcp.pop %v329
        %v331 = vmul.f32 %v329, %v330
        %v332 = vsub.f32 1.0, %v331
        %v333 = vmul.f32 %v330, %v332
        %v334 = vadd.f32 %v330, %v333
        %vm335 = vweird.f32 %v329
        %vm336 = vweird.f32 %v330
        %vm337 = vmor %vm335, %vm336
        %v338 = vsel %vm337, %v330, %v334
        %v339 = vand.u32 2147483647, %v329
        %vm340 = vcmp.eq.f32.partialorder %v339, 8.507059e+37
        %v341 = vand.u32 %v329, 2147483648
        %v342 = vor.u32 1.1754944e-38, %v341
        %v343 = vsel %vm340, %v342, %v338
        %v344 = vmul.f32 1.0, %v343
        %v345 = vtanh.pop %v325
        %v346 = vld [vmem:[#allocation3] sm:$0xff]
        %348 = vrot.lane.b32.xlu0 %v346, 32
        %v349 = vpop.permute.xlu0 %348
        %v351 = vmul.f32 %v344, %v349
        %353 = vrot.lane.b32.xlu0 %v345, 64
        %v354 = vpop.permute.xlu0 %353
        %v356 = vmul.f32 %v344, %v354
        %358 = vrot.lane.b32.xlu0 %v356, 32
        %v359 = vpop.permute.xlu0 %358
        %v361 = vadd.f32 %v351, %v359
        %v362 = vtanh.pop %v361
        %364 = vrot.lane.b32.xlu0 %v362, 64
        %v365 = vpop.permute.xlu0 %364
        %v367 = vmul.f32 %v344, %v365
        %369 = vrot.lane.b32.xlu0 %v361, 96
        %v370 = vpop.permute.xlu0 %369
        %372 = vst.msk [vmem:[#allocation3] sm:$0xff] %vm277, %v370
        %374 = vrot.lane.b32.xlu0 %v367, 32
        %v375 = vpop.permute.xlu0 %374
        %377 = vst.msk [vmem:[#allocation2] sm:$0xff] %vm277, %v375
        %378 = vst.msk [vmem:[%s247] sm:$0xff] %vm277, %v375
        %s379 = sand.u32 %s119, 1
        %s380 = scalar_lea.sflag [#allocation6], %s379
        %s381 = sand.u32 %s119, 1
        %s382 = smul.addr %s381, 8
        %s383 = scalar_lea.vmem [#allocation10], %s382
        // Predicated region
        $region53: #{tpu_custom_call.1} parent=35 // pred_check
          %p384 = pneg %p129
        $region54: #{tpu_custom_call.1} parent=35 // pred_check_branch
          %386 = sbr.rel (%p384) target = $region56
        $region55: #{tpu_custom_call.1} parent=35 // pred_region
          %388 = vsyncadd %s380, 0
          %s389 = smul.addr %s22, 8
          %s390 = scalar_lea.hbm %s4, %s389
          %s392 = sshll.u32 %s383, 4
          %s393 = int_to_ptr.vmem [resolvable:$true] %s392
          %s394 = sshll.u32 %s390, 4
          %s395 = int_to_ptr.hbm [resolvable:$true] %s394
          %397 = dma.vmem_to_hbm [thread:$0]  %s393, 128, %s395, %s380
        $region56: #{tpu_custom_call.1} parent=35 // pred_fallthru
          _
      $region36: #{tpu_custom_call.1} parent=5 // pred_fallthru
        _
      %p398 = scmp.le.s32.totalorder 2, %s17
      // Predicated region
      $region57: #{tpu_custom_call.1} parent=5 // pred_check
        %p399 = pneg %p398
      $region58: #{tpu_custom_call.1} parent=5 // pred_check_branch
        %401 = sbr.rel (%p399) target = $region60
      $region59: #{tpu_custom_call.1} parent=5 // pred_region
        %s402 = ssub.s32 %s17, 2
        // Predicated region
        $region61: #{tpu_custom_call.1} parent=59 // pred_check
          %p403 = pneg %p135
        $region62: #{tpu_custom_call.1} parent=59 // pred_check_branch
          %405 = sbr.rel (%p403) target = $region64
        $region63: #{tpu_custom_call.1} parent=59 // pred_region
          %s406 = sand.u32 %s120, 1
          %s407 = scalar_lea.sflag [#allocation6], %s406
          %s408 = sand.u32 %s120, 1
          %s409 = smul.addr %s408, 8
          %s410 = scalar_lea.vmem [#allocation10], %s409
          %412 = dma.done %s407, 128
        $region64: #{tpu_custom_call.1} parent=59 // pred_fallthru
          _
      $region60: #{tpu_custom_call.1} parent=5 // pred_fallthru
        _
    $region6: #{tpu_custom_call.1} parent=1 // loop_footer
      %s21 = sadd.s32 1, %s17
    $region7: #{tpu_custom_call.1} parent=1 // loop_footer_branch
      %16 = sbr.rel target = $region3
    $region8: #{tpu_custom_call.1} parent=1 // loop_exit
      _
    %413 = vsyncpa [#allocation5], 1
    %s414 = scalar_lea.sflag [#allocation5], 1
    %415 = vsyncpa %s414, 1
    %416 = vsyncpa [#allocation8], 1
    %417 = vsyncpa [#allocation6], 1
    %s418 = scalar_lea.sflag [#allocation6], 1
    %419 = vsyncpa %s418, 1

</llo_original>
